<compile_context>
chip_gen: v6e
topology: v6e:2x2x1
jax: 0.10.0
libtpu: 0.0.40
codegen_flags: <defaults>
</compile_context>

<pallas_src>
import functools

import jax
import jax.numpy as jnp
from jax.experimental import pallas as pl
from jax.experimental.pallas import tpu as pltpu


def _round_up(x, m):
    return (x + m - 1) // m * m


def _vfl_kernel(pred_ref, gt_ref, label_ref, out_ref, acc_ref, *, alpha, gamma):
    inner = pl.program_id(1)

    @pl.when(inner == 0)
    def _init():
        acc_ref[...] = jnp.zeros_like(acc_ref)

    x = pred_ref[...].astype(jnp.float32)      # logits
    y = gt_ref[...].astype(jnp.float32)        # targets
    lab = label_ref[...].astype(jnp.float32)   # label mask

    # Shared transcendental: e = exp(-|x|) feeds both sigmoid and the stable BCE.
    e = jnp.exp(-jnp.abs(x))
    log1p_e = jnp.log1p(e)
    inv = 1.0 / (1.0 + e)                      # exact reciprocal (keeps f32 check tight)
    sig = jnp.where(x >= 0.0, inv, e * inv)    # sigmoid(x) from e

    if gamma == 2.0:                           # integer-exponent fast path (no exp/log pow)
        sig_pow = sig * sig
    else:
        sig_pow = sig ** gamma

    # weight = alpha * sigmoid(x)^gamma * (1 - label) + gt * label
    weight = alpha * sig_pow * (1.0 - lab) + y * lab

    # numerically-stable BCE with logits (matches F.binary_cross_entropy_with_logits)
    bce = jnp.maximum(x, 0.0) - x * y + log1p_e

    # block-shaped accumulator: pure VPU adds each step, overlaps with DMA
    acc_ref[...] = acc_ref[...] + bce * weight

    @pl.when(inner == pl.num_programs(1) - 1)
    def _finalize():
        # single cross-lane reduction, broadcast into the (1,8,128) partial tile
        out_ref[...] = jnp.zeros(out_ref.shape, jnp.float32) + jnp.sum(acc_ref[...])


def varifocal_loss(pred_score, gt_score, label, alpha=0.75, gamma=2.0,
                   lanes=512, max_rows_per_block=1024):
    N = int(pred_score.size)
    p = pred_score.reshape(-1)
    g = gt_score.reshape(-1)
    l = label.reshape(-1)

    # lane-dense layout: (rows, lanes) with lanes a multiple of 128
    rows = -(-N // lanes)
    tm = min(max_rows_per_block, _round_up(rows, 8))
    n_blocks = -(-rows // tm)
    n_outer = 2 if n_blocks >= 2 else 1          # megacore split (v7x has 2 TCs)
    n_blocks = _round_up(n_blocks, n_outer)
    n_inner = n_blocks // n_outer
    R = n_blocks * tm
    pad = R * lanes - N

    if pad:
        # pad so padded elements contribute exactly 0 to the loss:
        #   pred = -1e4 -> sigmoid = 0 and log1p(exp(-1e4)) = 0 ; gt = label = 0
        p = jnp.pad(p, (0, pad), constant_values=-1e4)
        g = jnp.pad(g, (0, pad), constant_values=0)
        l = jnp.pad(l, (0, pad), constant_values=0)

    p2 = p.reshape(R, lanes)
    g2 = g.reshape(R, lanes)
    l2 = l.reshape(R, lanes)

    in_spec = pl.BlockSpec((tm, lanes), lambda o, i: (o * n_inner + i, 0))
    out_spec = pl.BlockSpec((1, 8, 128), lambda o, i: (o, 0, 0))

    out = pl.pallas_call(
        functools.partial(_vfl_kernel, alpha=float(alpha), gamma=float(gamma)),
        out_shape=jax.ShapeDtypeStruct((n_outer, 8, 128), jnp.float32),
        grid_spec=pltpu.PrefetchScalarGridSpec(
            num_scalar_prefetch=0,
            grid=(n_outer, n_inner),
            in_specs=[in_spec, in_spec, in_spec],
            out_specs=out_spec,
            scratch_shapes=[pltpu.VMEM((tm, lanes), jnp.float32)],
        ),
        compiler_params=pltpu.CompilerParams(
            dimension_semantics=("parallel", "arbitrary"),
            vmem_limit_bytes=32 * 1024 * 1024,
        ),
    )(p2, g2, l2)

    # tiny final reduction over the per-outer-block partial sums
    return jnp.sum(out[:, 0, 0])


def varifocal_loss_ref(pred_score, gt_score, label, alpha=0.75, gamma=2.0):
    x = pred_score.astype(jnp.float32)
    y = gt_score.astype(jnp.float32)
    lab = label.astype(jnp.float32)
    weight = alpha * jax.nn.sigmoid(x) ** gamma * (1.0 - lab) + y * lab
    bce = jnp.maximum(x, 0.0) - x * y + jnp.log1p(jnp.exp(-jnp.abs(x)))
    return jnp.sum(bce * weight)


if __name__ == "__main__":
    # small shapes: batch=2, anchors=64, classes=16
    B, A, C = 2, 64, 16
    key = jax.random.PRNGKey(0)
    k1, k2, k3 = jax.random.split(key, 3)

    pred_score = jax.random.normal(k1, (B, A, C), dtype=jnp.float32) * 2.0
    gt_score = jax.random.uniform(k2, (B, A, C), dtype=jnp.float32)
    label = (jax.random.uniform(k3, (B, A, C)) > 0.5).astype(jnp.float32)

    loss = jax.block_until_ready(varifocal_loss(pred_score, gt_score, label))
    ref = jax.block_until_ready(varifocal_loss_ref(pred_score, gt_score, label))

    assert jnp.allclose(loss, ref, rtol=1e-4, atol=1e-3), (loss, ref)
    print("KERNEL_OK")
</pallas_src>

<mosaic_0001>
module attributes {stable_mosaic.version = 11 : i64} {
  func.func @_vfl_kernel(%arg0: i32, %arg1: i32, %arg2: memref<8x512xf32, #tpu.memory_space<vmem>>, %arg3: memref<8x512xf32, #tpu.memory_space<vmem>>, %arg4: memref<8x512xf32, #tpu.memory_space<vmem>>, %arg5: memref<1x8x128xf32, #tpu.memory_space<vmem>>, %arg6: memref<8x512xf32, #tpu.memory_space<vmem>>) attributes {dimension_semantics = [#tpu.dimension_semantics<parallel>, #tpu.dimension_semantics<arbitrary>], iteration_bounds = array<i64: 1, 1>, scalar_prefetch = 0 : i64, scratch_operands = 1 : i64, tpu.core_type = #tpu.core_type<tc>, window_params = [{transform_indices = @transform_0, window_bounds = array<i64: 8, 512>}, {transform_indices = @transform_1, window_bounds = array<i64: 8, 512>}, {transform_indices = @transform_2, window_bounds = array<i64: 8, 512>}, {transform_indices = @transform_3, window_bounds = array<i64: 1, 8, 128>}]} {
    %c0_i32 = arith.constant 0 : i32
    %0 = arith.cmpi eq, %arg1, %c0_i32 : i32
    %1 = arith.extui %0 : i1 to i32
    %c0_i32_0 = arith.constant 0 : i32
    %2 = arith.cmpi ne, %1, %c0_i32_0 : i32
    scf.if %2 {
      %cst_18 = arith.constant 0.000000e+00 : f32
      %39 = vector.broadcast %cst_18 : f32 to vector<8x512xf32>
      %c0_19 = arith.constant 0 : index
      %c0_20 = arith.constant 0 : index
      %40 = vector.load %arg6[%c0_19, %c0_20] : memref<8x512xf32, #tpu.memory_space<vmem>>, vector<8x512xf32>
      tpu.vector_store %arg6[%c0_19, %c0_20], %39 {strides = array<i32>} : memref<8x512xf32, #tpu.memory_space<vmem>>, vector<8x512xf32>,
    } else {
    }
    %c0 = arith.constant 0 : index
    %c0_1 = arith.constant 0 : index
    %3 = vector.load %arg2[%c0, %c0_1] : memref<8x512xf32, #tpu.memory_space<vmem>>, vector<8x512xf32>
    %c0_2 = arith.constant 0 : index
    %c0_3 = arith.constant 0 : index
    %4 = vector.load %arg3[%c0_2, %c0_3] : memref<8x512xf32, #tpu.memory_space<vmem>>, vector<8x512xf32>
    %c0_4 = arith.constant 0 : index
    %c0_5 = arith.constant 0 : index
    %5 = vector.load %arg4[%c0_4, %c0_5] : memref<8x512xf32, #tpu.memory_space<vmem>>, vector<8x512xf32>
    %6 = math.absf %3 : vector<8x512xf32>
    %cst = arith.constant 0.000000e+00 : f32
    %7 = vector.broadcast %cst : f32 to vector<8x512xf32>
    %8 = arith.subf %7, %6 : vector<8x512xf32>
    %9 = math.exp %8 : vector<8x512xf32>
    %10 = math.log1p %9 : vector<8x512xf32>
    %cst_6 = arith.constant 1.000000e+00 : f32
    %11 = vector.broadcast %cst_6 : f32 to vector<8x512xf32>
    %12 = arith.addf %11, %9 : vector<8x512xf32>
    %cst_7 = arith.constant 1.000000e+00 : f32
    %13 = vector.broadcast %cst_7 : f32 to vector<8x512xf32>
    %14 = arith.divf %13, %12 : vector<8x512xf32>
    %cst_8 = arith.constant 0.000000e+00 : f32
    %15 = vector.broadcast %cst_8 : f32 to vector<8x512xf32>
    %16 = arith.cmpf oge, %3, %15 : vector<8x512xf32>
    %17 = arith.mulf %9, %14 : vector<8x512xf32>
    %18 = arith.select %16, %14, %17 : vector<8x512xi1>, vector<8x512xf32>
    %19 = arith.mulf %18, %18 : vector<8x512xf32>
    %cst_9 = arith.constant 7.500000e-01 : f32
    %20 = vector.broadcast %cst_9 : f32 to vector<8x512xf32>
    %21 = arith.mulf %20, %19 : vector<8x512xf32>
    %cst_10 = arith.constant 1.000000e+00 : f32
    %22 = vector.broadcast %cst_10 : f32 to vector<8x512xf32>
    %23 = arith.subf %22, %5 : vector<8x512xf32>
    %24 = arith.mulf %21, %23 : vector<8x512xf32>
    %25 = arith.mulf %4, %5 : vector<8x512xf32>
    %26 = arith.addf %24, %25 : vector<8x512xf32>
    %cst_11 = arith.constant 0.000000e+00 : f32
    %27 = vector.broadcast %cst_11 : f32 to vector<8x512xf32>
    %28 = arith.maximumf %3, %27 : vector<8x512xf32>
    %29 = arith.mulf %3, %4 : vector<8x512xf32>
    %30 = arith.subf %28, %29 : vector<8x512xf32>
    %31 = arith.addf %30, %10 : vector<8x512xf32>
    %c0_12 = arith.constant 0 : index
    %c0_13 = arith.constant 0 : index
    %32 = vector.load %arg6[%c0_12, %c0_13] : memref<8x512xf32, #tpu.memory_space<vmem>>, vector<8x512xf32>
    %33 = arith.mulf %31, %26 : vector<8x512xf32>
    %34 = arith.addf %32, %33 : vector<8x512xf32>
    %c0_14 = arith.constant 0 : index
    %c0_15 = arith.constant 0 : index
    %35 = vector.load %arg6[%c0_14, %c0_15] : memref<8x512xf32, #tpu.memory_space<vmem>>, vector<8x512xf32>
    tpu.vector_store %arg6[%c0_14, %c0_15], %34 {strides = array<i32>} : memref<8x512xf32, #tpu.memory_space<vmem>>, vector<8x512xf32>,
    %c0_i32_16 = arith.constant 0 : i32
    %36 = arith.cmpi eq, %arg1, %c0_i32_16 : i32
    %37 = arith.extui %36 : i1 to i32
    %c0_i32_17 = arith.constant 0 : i32
    %38 = arith.cmpi ne, %37, %c0_i32_17 : i32
    scf.if %38 {
      %cst_18 = arith.constant 0.000000e+00 : f32
      %39 = vector.broadcast %cst_18 : f32 to vector<1x8x128xf32>
      %c0_19 = arith.constant 0 : index
      %c0_20 = arith.constant 0 : index
      %40 = vector.load %arg6[%c0_19, %c0_20] : memref<8x512xf32, #tpu.memory_space<vmem>>, vector<8x512xf32>
      %41 = vector.shape_cast %40 : vector<8x512xf32> to vector<1x8x512xf32>
      %cst_21 = arith.constant dense<0.000000e+00> : vector<1xf32>
      %42 = vector.multi_reduction <add>, %41, %cst_21 [1, 2] : vector<1x8x512xf32> to vector<1xf32>
      %43 = vector.shape_cast %42 : vector<1xf32> to vector<1x1x1xf32>
      %44 = vector.extract %43[0, 0, 0] : f32 from vector<1x1x1xf32>
      %45 = vector.broadcast %44 : f32 to vector<1x8x128xf32>
      %46 = arith.addf %39, %45 : vector<1x8x128xf32>
      %c0_22 = arith.constant 0 : index
      %c0_23 = arith.constant 0 : index
      %c0_24 = arith.constant 0 : index
      %47 = vector.load %arg5[%c0_22, %c0_23, %c0_24] : memref<1x8x128xf32, #tpu.memory_space<vmem>>, vector<1x8x128xf32>
      tpu.vector_store %arg5[%c0_22, %c0_23, %c0_24], %46 {strides = array<i32>} : memref<1x8x128xf32, #tpu.memory_space<vmem>>, vector<1x8x128xf32>,
    } else {
    }
    return
  }
  func.func @transform_0(%arg0: i32, %arg1: i32) -> (i32, i32) {
    %c1_i32 = arith.constant 1 : i32
    %0 = arith.muli %arg0, %c1_i32 : i32
    %1 = arith.addi %0, %arg1 : i32
    %c0_i32 = arith.constant 0 : i32
    %c0_i32_0 = arith.constant 0 : i32
    return %1, %c0_i32 : i32, i32
  }
  func.func @transform_1(%arg0: i32, %arg1: i32) -> (i32, i32) {
    %c1_i32 = arith.constant 1 : i32
    %0 = arith.muli %arg0, %c1_i32 : i32
    %1 = arith.addi %0, %arg1 : i32
    %c0_i32 = arith.constant 0 : i32
    %c0_i32_0 = arith.constant 0 : i32
    return %1, %c0_i32 : i32, i32
  }
  func.func @transform_2(%arg0: i32, %arg1: i32) -> (i32, i32) {
    %c1_i32 = arith.constant 1 : i32
    %0 = arith.muli %arg0, %c1_i32 : i32
    %1 = arith.addi %0, %arg1 : i32
    %c0_i32 = arith.constant 0 : i32
    %c0_i32_0 = arith.constant 0 : i32
    return %1, %c0_i32 : i32, i32
  }
  func.func @transform_3(%arg0: i32, %arg1: i32) -> (i32, i32, i32) {
    %c0_i32 = arith.constant 0 : i32
    %c0_i32_0 = arith.constant 0 : i32
    %c0_i32_1 = arith.constant 0 : i32
    return %arg0, %c0_i32, %c0_i32_0 : i32, i32, i32
  }
}

</mosaic_0001>

<llo_original>
// kernel: tpu_custom_call.1
$region0: #{tpu_custom_call.1}
  #allocation0 [shape = 'u32[]', space=smem, size = 0x4, offset = 0x4, fixed_abs, tag = 'smem constant byte address 0x4 - core index']
  #allocation1 [shape = 'u32[144,128]{1,0:T(1,128)}', space=vmem, size = 0x12000, scoped, tag = 'internal scratch']
  #allocation2 [shape = 'f32[8,512]{1,0:T(8,128)}', space=vmem, size = 0x4000, scoped, tag = 'scratch operand']
  %s0 = inlined_call_operand.hbm [shape: f32[8,512], index: 0, kind: input, shape index: {}]
  %s1 = inlined_call_operand.hbm [shape: f32[8,512], index: 1, kind: input, shape index: {}]
  %s2 = inlined_call_operand.hbm [shape: f32[8,512], index: 2, kind: input, shape index: {}]
  %s3 = inlined_call_operand.hbm [shape: f32[1,8,128], index: 3, kind: output, shape index: {}]
  %s4 = sld [smem:[#allocation0]]
  $region42: #{tpu_custom_call.1} parent=0
    _
  %s6 = ssub.s32 1, %s4
  %s7 = scalar_select 0, %s6, %s4
  $region1: #{tpu_custom_call.1} parent=0
    #allocation3 [shape = 'u8[16384]{0}', space=vmem, size = 0x4000, scoped, tag = 'input window, operand 0, single buffered']
    #allocation4 [shape = 's32[1]{0}', space=sflag, size = 0x4, scoped, tag = 'scoped memory for tpu_custom_call.1']
    #allocation5 [shape = 's32[1]{0}', space=sflag, size = 0x4, scoped, tag = 'scoped memory for tpu_custom_call.1']
    #allocation6 [shape = 'u8[16384]{0}', space=vmem, size = 0x4000, scoped, tag = 'input window, operand 1, single buffered']
    #allocation7 [shape = 's32[1]{0}', space=sflag, size = 0x4, scoped, tag = 'scoped memory for tpu_custom_call.1']
    #allocation8 [shape = 'u8[16384]{0}', space=vmem, size = 0x4000, scoped, tag = 'input window, operand 2, single buffered']
    #allocation9 [shape = 'u8[4096]{0}', space=vmem, size = 0x1000, scoped, tag = 'output window, operand 0, single buffered']
    %8 = vsyncpa [#allocation4], 0
    %9 = vsyncpa [#allocation7], 0
    %10 = vsyncpa [#allocation5], 0
    // Predicated region
    $region2: #{tpu_custom_call.1} parent=1 // pred_check
      _
    $region3: #{tpu_custom_call.1} parent=1 // pred_check_branch
      %12 = sbr.rel (0) target = $region5
    $region4: #{tpu_custom_call.1} parent=1 // pred_region
      %s13 = sadd.s32 0, 0
      %s15 = ssub.s32 512, 512
      %16 = vsyncadd [#allocation4], %s15
      %s17 = smul.addr %s13, 4
      %s18 = smul.addr %s17, 128
      %s19 = scalar_lea.hbm %s0, %s18
      %s21 = sshll.u32 [#allocation3], 4
      %s22 = int_to_ptr.vmem [resolvable:$true] %s21
      %24 = dma.hbm_to_vmem [thread:$0]  %s19, 512, %s22, [#allocation4]
    $region5: #{tpu_custom_call.1} parent=1 // pred_fallthru
      _
    // Predicated region
    $region6: #{tpu_custom_call.1} parent=1 // pred_check
      _
    $region7: #{tpu_custom_call.1} parent=1 // pred_check_branch
      %26 = sbr.rel (0) target = $region9
    $region8: #{tpu_custom_call.1} parent=1 // pred_region
      %s27 = sadd.s32 0, 0
      %s29 = ssub.s32 512, 512
      %30 = vsyncadd [#allocation7], %s29
      %s31 = smul.addr %s27, 4
      %s32 = smul.addr %s31, 128
      %s33 = scalar_lea.hbm %s1, %s32
      %s35 = sshll.u32 [#allocation6], 4
      %s36 = int_to_ptr.vmem [resolvable:$true] %s35
      %38 = dma.hbm_to_vmem [thread:$0]  %s33, 512, %s36, [#allocation7]
    $region9: #{tpu_custom_call.1} parent=1 // pred_fallthru
      _
    // Predicated region
    $region10: #{tpu_custom_call.1} parent=1 // pred_check
      _
    $region11: #{tpu_custom_call.1} parent=1 // pred_check_branch
      %40 = sbr.rel (0) target = $region13
    $region12: #{tpu_custom_call.1} parent=1 // pred_region
      %s41 = sadd.s32 0, 0
      %s43 = ssub.s32 512, 512
      %44 = vsyncadd [#allocation7], %s43
      %s45 = smul.addr %s41, 4
      %s46 = smul.addr %s45, 128
      %s47 = scalar_lea.hbm %s2, %s46
      %s49 = sshll.u32 [#allocation8], 4
      %s50 = int_to_ptr.vmem [resolvable:$true] %s49
      %52 = dma.hbm_to_vmem [thread:$0]  %s47, 512, %s50, [#allocation7]
    $region13: #{tpu_custom_call.1} parent=1 // pred_fallthru
      _
    // Predicated region
    $region14: #{tpu_custom_call.1} parent=1 // pred_check
      _
    $region15: #{tpu_custom_call.1} parent=1 // pred_check_branch
      %54 = sbr.rel (0) target = $region17
    $region16: #{tpu_custom_call.1} parent=1 // pred_region
      %55 = dma.done [#allocation4], 512
    $region17: #{tpu_custom_call.1} parent=1 // pred_fallthru
      _
    // Predicated region
    $region18: #{tpu_custom_call.1} parent=1 // pred_check
      _
    $region19: #{tpu_custom_call.1} parent=1 // pred_check_branch
      %57 = sbr.rel (0) target = $region21
    $region20: #{tpu_custom_call.1} parent=1 // pred_region
      %58 = dma.done [#allocation7], 512
    $region21: #{tpu_custom_call.1} parent=1 // pred_fallthru
      _
    // Predicated region
    $region22: #{tpu_custom_call.1} parent=1 // pred_check
      _
    $region23: #{tpu_custom_call.1} parent=1 // pred_check_branch
      %60 = sbr.rel (0) target = $region25
    $region24: #{tpu_custom_call.1} parent=1 // pred_region
      %61 = dma.done [#allocation7], 512
    $region25: #{tpu_custom_call.1} parent=1 // pred_fallthru
      _
    %s62 = sadd.s32 0, 0
    %s63 = sadd.s32 0, 0
    %s64 = sadd.s32 0, 0
    %p65 = scmp.eq.s32.totalorder 0, 0
    // Predicated region
    $region26: #{tpu_custom_call.1} parent=1 // pred_check
      %p66 = pneg %p65
    $region27: #{tpu_custom_call.1} parent=1 // pred_check_branch
      %68 = sbr.rel (%p66) target = $region29
    $region28: #{tpu_custom_call.1} parent=1 // pred_region
      %69 = vst [vmem:[#allocation2] sm:$0xff] 0.0
      %70 = vst [vmem:[#allocation2 + $0x8] sm:$0xff] 0.0
      %71 = vst [vmem:[#allocation2 + $0x10] sm:$0xff] 0.0
      %72 = vst [vmem:[#allocation2 + $0x18] sm:$0xff] 0.0
    $region29: #{tpu_custom_call.1} parent=1 // pred_fallthru
      _
    %v73 = vld [vmem:[#allocation3] sm:$0xff]
    %v74 = vld [vmem:[#allocation3 + $0x8] sm:$0xff]
    %v75 = vld [vmem:[#allocation3 + $0x10] sm:$0xff]
    %v76 = vld [vmem:[#allocation3 + $0x18] sm:$0xff]
    %v77 = vld [vmem:[#allocation6] sm:$0xff]
    %v78 = vld [vmem:[#allocation6 + $0x8] sm:$0xff]
    %v79 = vld [vmem:[#allocation6 + $0x10] sm:$0xff]
    %v80 = vld [vmem:[#allocation6 + $0x18] sm:$0xff]
    %v81 = vld [vmem:[#allocation8] sm:$0xff]
    %v82 = vld [vmem:[#allocation8 + $0x8] sm:$0xff]
    %v83 = vld [vmem:[#allocation8 + $0x10] sm:$0xff]
    %v84 = vld [vmem:[#allocation8 + $0x18] sm:$0xff]
    %v85 = vand.u32 2147483647, %v73
    %v86 = vand.u32 2147483647, %v74
    %v87 = vand.u32 2147483647, %v75
    %v88 = vand.u32 2147483647, %v76
    %v89 = vsub.f32 0.0, %v85
    %v90 = vsub.f32 0.0, %v86
    %v91 = vsub.f32 0.0, %v87
    %v92 = vsub.f32 0.0, %v88
    %v93 = vmul.f32 %v89, 1.442695
    %v94 = vpow.pop %v93
    %v95 = vmul.f32 %v90, 1.442695
    %v96 = vpow.pop %v95
    %v97 = vmul.f32 %v91, 1.442695
    %v98 = vpow.pop %v97
    %v99 = vmul.f32 %v92, 1.442695
    %v100 = vpow.pop %v99
    %v101 = vadd.f32 %v94, 1.0
    %v102 = vlog2.pop %v101
    %v103 = vmul.f32 %v102, 0.6931472
    %v104 = vmul.f32 -0.5, %v94
    %v105 = vadd.f32 %v104, 1.0
    %v106 = vmul.f32 %v105, %v94
    %v107 = vand.u32 2147483647, %v94
    %vm108 = vcmp.lt.f32.partialorder %v107, 0.0004427343
    %v109 = vsel %vm108, %v106, %v103
    %v110 = vadd.f32 %v96, 1.0
    %v111 = vlog2.pop %v110
    %v112 = vmul.f32 %v111, 0.6931472
    %v113 = vmul.f32 -0.5, %v96
    %v114 = vadd.f32 %v113, 1.0
    %v115 = vmul.f32 %v114, %v96
    %v116 = vand.u32 2147483647, %v96
    %vm117 = vcmp.lt.f32.partialorder %v116, 0.0004427343
    %v118 = vsel %vm117, %v115, %v112
    %v119 = vadd.f32 %v98, 1.0
    %v120 = vlog2.pop %v119
    %v121 = vmul.f32 %v120, 0.6931472
    %v122 = vmul.f32 -0.5, %v98
    %v123 = vadd.f32 %v122, 1.0
    %v124 = vmul.f32 %v123, %v98
    %v125 = vand.u32 2147483647, %v98
    %vm126 = vcmp.lt.f32.partialorder %v125, 0.0004427343
    %v127 = vsel %vm126, %v124, %v121
    %v128 = vadd.f32 %v100, 1.0
    %v129 = vlog2.pop %v128
    %v130 = vmul.f32 %v129, 0.6931472
    %v131 = vmul.f32 -0.5, %v100
    %v132 = vadd.f32 %v131, 1.0
    %v133 = vmul.f32 %v132, %v100
    %v134 = vand.u32 2147483647, %v100
    %vm135 = vcmp.lt.f32.partialorder %v134, 0.0004427343
    %v136 = vsel %vm135, %v133, %v130
    %v137 = vadd.f32 %v94, 1.0
    %v138 = vadd.f32 %v96, 1.0
    %v139 = vadd.f32 %v98, 1.0
    %v140 = vadd.f32 %v100, 1.0
    %v141 = vrcp.pop %v137
    %v142 = vmul.f32 1.0, %v141
    %v143 = vrcp.pop %v138
    %v144 = vmul.f32 1.0, %v143
    %v145 = vrcp.pop %v139
    %v146 = vmul.f32 1.0, %v145
    %v147 = vrcp.pop %v140
    %v148 = vmul.f32 1.0, %v147
    %vm149 = vcmp.ge.f32.partialorder %v73, 0.0
    %vm150 = vcmp.ge.f32.partialorder %v74, 0.0
    %vm151 = vcmp.ge.f32.partialorder %v75, 0.0
    %vm152 = vcmp.ge.f32.partialorder %v76, 0.0
    %v153 = vmul.f32 %v94, %v142
    %v154 = vmul.f32 %v96, %v144
    %v155 = vmul.f32 %v98, %v146
    %v156 = vmul.f32 %v100, %v148
    %v157 = vsel %vm149, %v142, %v153
    %v158 = vsel %vm150, %v144, %v154
    %v159 = vsel %vm151, %v146, %v155
    %v160 = vsel %vm152, %v148, %v156
    %v161 = vmul.f32 %v157, %v157
    %v162 = vmul.f32 %v158, %v158
    %v163 = vmul.f32 %v159, %v159
    %v164 = vmul.f32 %v160, %v160
    %v165 = vmul.f32 %v161, 0.75
    %v166 = vmul.f32 %v162, 0.75
    %v167 = vmul.f32 %v163, 0.75
    %v168 = vmul.f32 %v164, 0.75
    %v169 = vsub.f32 1.0, %v81
    %v170 = vsub.f32 1.0, %v82
    %v171 = vsub.f32 1.0, %v83
    %v172 = vsub.f32 1.0, %v84
    %v173 = vmul.f32 %v165, %v169
    %v174 = vmul.f32 %v166, %v170
    %v175 = vmul.f32 %v167, %v171
    %v176 = vmul.f32 %v168, %v172
    %v177 = vmul.f32 %v77, %v81
    %v178 = vmul.f32 %v78, %v82
    %v179 = vmul.f32 %v79, %v83
    %v180 = vmul.f32 %v80, %v84
    %v181 = vadd.f32 %v173, %v177
    %v182 = vadd.f32 %v174, %v178
    %v183 = vadd.f32 %v175, %v179
    %v184 = vadd.f32 %v176, %v180
    %v185 = vmax.f32 %v73, 0.0
    %v186 = vmax.f32 %v74, 0.0
    %v187 = vmax.f32 %v75, 0.0
    %v188 = vmax.f32 %v76, 0.0
    %v189 = vmul.f32 %v73, %v77
    %v190 = vmul.f32 %v74, %v78
    %v191 = vmul.f32 %v75, %v79
    %v192 = vmul.f32 %v76, %v80
    %v193 = vsub.f32 %v185, %v189
    %v194 = vsub.f32 %v186, %v190
    %v195 = vsub.f32 %v187, %v191
    %v196 = vsub.f32 %v188, %v192
    %v197 = vadd.f32 %v193, %v109
    %v198 = vadd.f32 %v194, %v118
    %v199 = vadd.f32 %v195, %v127
    %v200 = vadd.f32 %v196, %v136
    %v201 = vld [vmem:[#allocation2] sm:$0xff]
    %v202 = vld [vmem:[#allocation2 + $0x8] sm:$0xff]
    %v203 = vld [vmem:[#allocation2 + $0x10] sm:$0xff]
    %v204 = vld [vmem:[#allocation2 + $0x18] sm:$0xff]
    %v205 = vmul.f32 %v197, %v181
    %v206 = vmul.f32 %v198, %v182
    %v207 = vmul.f32 %v199, %v183
    %v208 = vmul.f32 %v200, %v184
    %v209 = vadd.f32 %v201, %v205
    %v210 = vadd.f32 %v202, %v206
    %v211 = vadd.f32 %v203, %v207
    %v212 = vadd.f32 %v204, %v208
    %213 = vst [vmem:[#allocation2] sm:$0xff] %v209
    %214 = vst [vmem:[#allocation2 + $0x8] sm:$0xff] %v210
    %215 = vst [vmem:[#allocation2 + $0x10] sm:$0xff] %v211
    %216 = vst [vmem:[#allocation2 + $0x18] sm:$0xff] %v212
    // Predicated region
    $region30: #{tpu_custom_call.1} parent=1 // pred_check
      %p217 = pneg %p65
    $region31: #{tpu_custom_call.1} parent=1 // pred_check_branch
      %219 = sbr.rel (%p217) target = $region33
    $region32: #{tpu_custom_call.1} parent=1 // pred_region
      %v220 = vld [vmem:[#allocation2] sm:$0xff]
      %v221 = vld [vmem:[#allocation2 + $0x8] sm:$0xff]
      %v222 = vld [vmem:[#allocation2 + $0x10] sm:$0xff]
      %v223 = vld [vmem:[#allocation2 + $0x18] sm:$0xff]
      %v224 = vadd.f32 %v220, %v221
      %v225 = vadd.f32 %v224, %v222
      %v226 = vadd.f32 %v225, %v223
      %227 = vadd.xlane.f32.xlu0 %v226
      %v228 = vpop.xlane.xlu0 %227
      %v229 = vrot.slane %v228, 4
      %v230 = vadd.f32 %v228, %v229
      %v231 = vrot.slane %v230, 2
      %v232 = vadd.f32 %v230, %v231
      %v233 = vrot.slane %v232, 1
      %v234 = vadd.f32 %v232, %v233
      %s235 = vtos %v234
      %v236 = vstv %s235
      %v237 = vadd.f32 %v236, 0.0
      %238 = vst [vmem:[#allocation9] sm:$0xff] %v237
    $region33: #{tpu_custom_call.1} parent=1 // pred_fallthru
      _
    // Predicated region
    $region34: #{tpu_custom_call.1} parent=1 // pred_check
      _
    $region35: #{tpu_custom_call.1} parent=1 // pred_check_branch
      %240 = sbr.rel (0) target = $region37
    $region36: #{tpu_custom_call.1} parent=1 // pred_region
      %s242 = ssub.s32 128, 128
      %243 = vsyncadd [#allocation5], %s242
      %s245 = sshll.u32 [#allocation9], 4
      %s246 = int_to_ptr.vmem [resolvable:$true] %s245
      %248 = dma.vmem_to_hbm [thread:$0]  %s246, 128, %s3, [#allocation5]
    $region37: #{tpu_custom_call.1} parent=1 // pred_fallthru
      _
    // Predicated region
    $region38: #{tpu_custom_call.1} parent=1 // pred_check
      _
    $region39: #{tpu_custom_call.1} parent=1 // pred_check_branch
      %250 = sbr.rel (0) target = $region41
    $region40: #{tpu_custom_call.1} parent=1 // pred_region
      %251 = dma.done [#allocation5], 128
    $region41: #{tpu_custom_call.1} parent=1 // pred_fallthru
      _
    %252 = vsyncpa [#allocation4], 1
    %253 = vsyncpa [#allocation7], 1
    %254 = vsyncpa [#allocation5], 1

</llo_original>
